<compile_context>
chip_gen: v7x
topology: tpu7x:2x2x1
jax: 0.10.0
libtpu: 0.0.40
codegen_flags: <defaults>
</compile_context>

<pallas_src>
import jax
import jax.numpy as jnp
from jax.experimental import pallas as pl
from jax.experimental.pallas import tpu as pltpu


def _round_up(x, m):
    return ((x + m - 1) // m) * m


# Budget (bytes) for the double-buffered emb block before we split the K axis.
_SINGLE_K_EMB_BUDGET = 12 * (1 << 20)


# ---------------------------------------------------------------------------
# Kernel bodies
# ---------------------------------------------------------------------------

def _make_dist_kernel(split_k, tk, compute_dtype, precision):
    """return_dist=True path: writes both logits and concept distances."""

    def kernel(emb_ref, cavs_t_ref, icpt_ref, w_t_ref, bias_ref,
               out_ref, dist_ref):
        if not split_k:
            a = emb_ref[...].astype(compute_dtype)
            dist = jnp.dot(a, cavs_t_ref[...],
                           preferred_element_type=jnp.float32,
                           precision=precision) + icpt_ref[...]
            dist_ref[...] = dist.astype(dist_ref.dtype)
            logits = jnp.dot(dist.astype(compute_dtype), w_t_ref[...],
                             preferred_element_type=jnp.float32,
                             precision=precision)
            out_ref[...] = (logits + bias_ref[...]).astype(out_ref.dtype)
        else:
            k = pl.program_id(1)

            @pl.when(k == 0)
            def _init():
                dist_ref[...] = jnp.zeros_like(dist_ref)

            a = emb_ref[...].astype(compute_dtype)
            start = pl.multiple_of(k * tk, tk)
            w_slab = cavs_t_ref[pl.ds(start, tk), :]
            dist_ref[...] += jnp.dot(a, w_slab,
                                     preferred_element_type=jnp.float32,
                                     precision=precision)

            @pl.when(k == pl.num_programs(1) - 1)
            def _epilogue():
                dist = dist_ref[...] + icpt_ref[...]
                dist_ref[...] = dist
                logits = jnp.dot(dist.astype(compute_dtype), w_t_ref[...],
                                 preferred_element_type=jnp.float32,
                                 precision=precision)
                out_ref[...] = (logits + bias_ref[...]).astype(out_ref.dtype)

    return kernel


def _make_fused_kernel(split_k, tk, compute_dtype, precision):
    """return_dist=False fast path: out = emb @ fused_w + fused_b."""

    def kernel(emb_ref, fw_ref, fb_ref, out_ref):
        if not split_k:
            a = emb_ref[...].astype(compute_dtype)
            logits = jnp.dot(a, fw_ref[...],
                             preferred_element_type=jnp.float32,
                             precision=precision)
            out_ref[...] = (logits + fb_ref[...]).astype(out_ref.dtype)
        else:
            k = pl.program_id(1)

            @pl.when(k == 0)
            def _init():
                out_ref[...] = jnp.zeros_like(out_ref)

            a = emb_ref[...].astype(compute_dtype)
            start = pl.multiple_of(k * tk, tk)
            w_slab = fw_ref[pl.ds(start, tk), :]
            out_ref[...] += jnp.dot(a, w_slab,
                                    preferred_element_type=jnp.float32,
                                    precision=precision)

            @pl.when(k == pl.num_programs(1) - 1)
            def _epilogue():
                out_ref[...] = out_ref[...] + fb_ref[...]

    return kernel


# ---------------------------------------------------------------------------
# Hoisted, once-per-model parameter preparation
# ---------------------------------------------------------------------------

def prepare_pcbm_params(cavs, intercepts, norms, weight, bias,
                        matmul_dtype=jnp.bfloat16, block_k=1024,
                        precision=None):
    """Transpose, norm-fold, classifier-fold and lane-dense-pad the parameters.

    cavs:       (C, D)   concept activation vectors
    intercepts: (C, 1)
    norms:      (C, 1)
    weight:     (n_classes, C)   nn.Linear weight
    bias:       (n_classes,)
    """
    C, D = cavs.shape
    n_classes = weight.shape[0]

    cavs = jnp.asarray(cavs, jnp.float32)
    intercepts = jnp.asarray(intercepts, jnp.float32).reshape(C, 1)
    norms = jnp.asarray(norms, jnp.float32).reshape(C, 1)
    weight = jnp.asarray(weight, jnp.float32)
    bias = jnp.asarray(bias, jnp.float32).reshape(1, n_classes)

    # Fold the per-concept norm division into the weights (one fewer operand
    # and one fewer VPU multiply per batch tile; benign fp reassociation).
    cavs_s = cavs / norms          # (C, D)
    icpt_s = intercepts / norms    # (C, 1)

    C_p = _round_up(max(C, 1), 128)
    NC_p = _round_up(max(n_classes, 1), 128)
    D128 = _round_up(max(D, 1), 128)
    TK = min(_round_up(block_k, 128), D128)
    D_p = _round_up(D128, TK)

    cavs_t = jnp.zeros((D_p, C_p), matmul_dtype).at[:D, :C].set(
        cavs_s.T.astype(matmul_dtype))
    icpt_row = jnp.zeros((1, C_p), jnp.float32).at[:, :C].set(
        icpt_s.reshape(1, C))
    w_t = jnp.zeros((C_p, NC_p), matmul_dtype).at[:C, :n_classes].set(
        weight.T.astype(matmul_dtype))
    bias_row = jnp.zeros((1, NC_p), jnp.float32).at[:, :n_classes].set(bias)

    # return_dist=False fast path: fold the classifier through the concept
    # layer (done once, at full precision, on the host/XLA side).
    fused_w_f32 = jnp.dot(cavs_s.T, weight.T,
                          precision=jax.lax.Precision.HIGHEST)          # (D, NC)
    fused_b_f32 = jnp.dot(icpt_s.reshape(1, C), weight.T,
                          precision=jax.lax.Precision.HIGHEST) + bias   # (1, NC)
    fused_w = jnp.zeros((D_p, NC_p), matmul_dtype).at[:D, :n_classes].set(
        fused_w_f32.astype(matmul_dtype))
    fused_b = jnp.zeros((1, NC_p), jnp.float32).at[:, :n_classes].set(
        fused_b_f32)

    return {
        "cavs_t": cavs_t, "icpt": icpt_row, "w_t": w_t, "bias": bias_row,
        "fused_w": fused_w, "fused_b": fused_b,
        "C": C, "n_classes": n_classes, "D": D, "D_p": D_p, "TK": TK,
        "matmul_dtype": matmul_dtype, "precision": precision,
    }


# ---------------------------------------------------------------------------
# Forward
# ---------------------------------------------------------------------------

def pcbm_forward_prepared(emb, params, return_dist=False, block_b=512,
                          force_split_k=False):
    """Fused PCBM forward using pre-padded / pre-folded parameters."""
    B, D = emb.shape
    assert D == params["D"], f"embedding dim {D} != prepared dim {params['D']}"

    C, n_classes = params["C"], params["n_classes"]
    D_p, TK = params["D_p"], params["TK"]
    C_p = params["cavs_t"].shape[1]
    NC_p = params["w_t"].shape[1]
    mm_dtype = params["matmul_dtype"]
    precision = params["precision"]
    mm_bytes = jnp.dtype(mm_dtype).itemsize
    emb_bytes = emb.dtype.itemsize

    # Batch tile: multiple of 8 sublanes, capped by block_b; ensure at least
    # two batch tiles when possible so the "parallel" axis can feed both
    # TensorCores on v7x.
    B8 = _round_up(B, 8)
    TB = min(_round_up(block_b, 8), B8)
    if TB >= B8 and B8 >= 16:
        TB = _round_up(B8 // 2, 8)
    B_p = _round_up(B, TB)

    # Collapse the K axis unless the double-buffered emb block would blow the
    # VMEM budget (very large D only).
    split_k = force_split_k or (2 * TB * D_p * emb_bytes > _SINGLE_K_EMB_BUDGET)
    tk_eff = TK if split_k else D_p

    # Pad the streamed embedding only if the ragged remainder requires it; no
    # host-side dtype cast (the kernel casts per-tile in VMEM).
    pad_b, pad_d = B_p - B, D_p - D
    emb_in = emb if (pad_b == 0 and pad_d == 0) else jnp.pad(
        emb, ((0, pad_b), (0, pad_d)))

    if split_k:
        grid = (B_p // TB, D_p // TK)
        emb_spec = pl.BlockSpec((TB, TK), lambda i, k: (i, k))
        res_map = lambda i, k: (0, 0)
        out_map = lambda i, k: (i, 0)
        dims = ("parallel", "arbitrary")
    else:
        grid = (B_p // TB,)
        emb_spec = pl.BlockSpec((TB, D_p), lambda i: (i, 0))
        res_map = lambda i: (0, 0)
        out_map = lambda i: (i, 0)
        dims = ("parallel",)

    # VMEM footprint estimate -> scoped limit (floor 32 MiB, cap 64 MiB/v7x).
    emb_block_bytes = TB * tk_eff * emb_bytes
    if return_dist:
        weight_bytes = (D_p * C_p + C_p * NC_p) * mm_bytes + (C_p + NC_p) * 4
        out_bytes = TB * (NC_p + C_p) * 4
    else:
        weight_bytes = D_p * NC_p * mm_bytes + NC_p * 4
        out_bytes = TB * NC_p * 4
    est = 2 * emb_block_bytes + 2 * weight_bytes + 2 * out_bytes
    vmem_limit = int(min(max(2 * est, 32 * (1 << 20)), 64 * (1 << 20)))

    cp = pltpu.CompilerParams(dimension_semantics=dims,
                              vmem_limit_bytes=vmem_limit)

    if return_dist:
        kernel = _make_dist_kernel(split_k, TK, mm_dtype, precision)
        out_shape = (jax.ShapeDtypeStruct((B_p, NC_p), jnp.float32),
                     jax.ShapeDtypeStruct((B_p, C_p), jnp.float32))
        in_specs = [
            emb_spec,                               # emb (streamed)
            pl.BlockSpec((D_p, C_p), res_map),      # (cavs/norms).T (resident)
            pl.BlockSpec((1, C_p), res_map),        # intercepts/norms
            pl.BlockSpec((C_p, NC_p), res_map),     # W.T
            pl.BlockSpec((1, NC_p), res_map),       # bias
        ]
        out_specs = [pl.BlockSpec((TB, NC_p), out_map),
                     pl.BlockSpec((TB, C_p), out_map)]
        out_p, dist_p = pl.pallas_call(
            kernel,
            out_shape=out_shape,
            grid_spec=pltpu.PrefetchScalarGridSpec(
                num_scalar_prefetch=0, grid=grid,
                in_specs=in_specs, out_specs=out_specs),
            compiler_params=cp,
        )(emb_in, params["cavs_t"], params["icpt"], params["w_t"],
          params["bias"])
        return out_p[:B, :n_classes], dist_p[:B, :C]

    kernel = _make_fused_kernel(split_k, TK, mm_dtype, precision)
    out_shape = jax.ShapeDtypeStruct((B_p, NC_p), jnp.float32)
    in_specs = [
        emb_spec,                                   # emb (streamed)
        pl.BlockSpec((D_p, NC_p), res_map),         # fused (cavs/norms).T @ W.T
        pl.BlockSpec((1, NC_p), res_map),           # fused bias
    ]
    out_specs = pl.BlockSpec((TB, NC_p), out_map)
    out_p = pl.pallas_call(
        kernel,
        out_shape=out_shape,
        grid_spec=pltpu.PrefetchScalarGridSpec(
            num_scalar_prefetch=0, grid=grid,
            in_specs=in_specs, out_specs=out_specs),
        compiler_params=cp,
    )(emb_in, params["fused_w"], params["fused_b"])
    return out_p[:B, :n_classes]


def pcbm_forward(emb, cavs, intercepts, norms, weight, bias,
                 return_dist=False, matmul_dtype=jnp.bfloat16):
    """Convenience wrapper (for real use, call prepare_pcbm_params once)."""
    params = prepare_pcbm_params(cavs, intercepts, norms, weight, bias,
                                 matmul_dtype=matmul_dtype)
    return pcbm_forward_prepared(emb, params, return_dist=return_dist)


# TODO(synk): prune / prune_and_normalize / analyze_classifier / test_step are
# host-side parameter-editing & reporting utilities, not part of the forward
# pass; they remain plain JAX/NumPy and are not translated to Pallas.


if __name__ == "__main__":
    key = jax.random.PRNGKey(0)
    B, D = 2, 32          # batch, embedding dim
    C, n_classes = 8, 5   # n_concepts, n_classes

    k1, k2, k3, k4, k5, k6, k7 = jax.random.split(key, 7)
    emb = jax.random.normal(k1, (B, D), dtype=jnp.float32)
    cavs = jax.random.normal(k2, (C, D), dtype=jnp.float32)
    intercepts = jax.random.normal(k3, (C, 1), dtype=jnp.float32)
    norms = jnp.abs(jax.random.normal(k4, (C, 1), dtype=jnp.float32)) + 0.5
    weight = jax.random.normal(k5, (n_classes, C), dtype=jnp.float32) * 0.1
    bias = jax.random.normal(k6, (n_classes,), dtype=jnp.float32) * 0.1

    # Pure-JAX reference of the exact PyTorch semantics.
    margins = (cavs @ emb.T + intercepts) / norms          # (C, B)
    dist_ref = margins.T                                   # (B, C)
    out_ref = dist_ref @ weight.T + bias                   # (B, n_classes)

    # --- f32 weights, collapsed (single-K) grid: tight tolerance ----------
    params_f32 = prepare_pcbm_params(cavs, intercepts, norms, weight, bias,
                                     matmul_dtype=jnp.float32)
    out, dist = pcbm_forward_prepared(emb, params_f32, return_dist=True)
    out_only = pcbm_forward_prepared(emb, params_f32, return_dist=False)
    jax.block_until_ready((out, dist, out_only))

    assert out.shape == (B, n_classes) and dist.shape == (B, C)
    assert jnp.allclose(dist, dist_ref, atol=1e-4, rtol=1e-4)
    assert jnp.allclose(out, out_ref, atol=1e-4, rtol=1e-4)
    assert jnp.allclose(out_only, out_ref, atol=1e-4, rtol=1e-4)

    # --- bf16 streaming default (halved weight bytes, native MXU path) ----
    params_bf16 = prepare_pcbm_params(cavs, intercepts, norms, weight, bias)
    out_bf, dist_bf = pcbm_forward_prepared(emb, params_bf16, return_dist=True)
    out_only_bf = pcbm_forward_prepared(emb, params_bf16, return_dist=False)
    jax.block_until_ready((out_bf, dist_bf, out_only_bf))

    assert jnp.allclose(dist_bf, dist_ref, atol=1e-1, rtol=1e-1)
    assert jnp.allclose(out_bf, out_ref, atol=1e-1, rtol=1e-1)
    assert jnp.allclose(out_only_bf, out_ref, atol=1e-1, rtol=1e-1)

    # --- forced K-split path (coverage for the very-large-D branch) -------
    D2 = 256
    emb2 = jax.random.normal(k7, (B, D2), dtype=jnp.float32)
    cavs2 = jax.random.normal(k2, (C, D2), dtype=jnp.float32)
    params2 = prepare_pcbm_params(cavs2, intercepts, norms, weight, bias,
                                  matmul_dtype=jnp.float32, block_k=128)
    out2, dist2 = pcbm_forward_prepared(emb2, params2, return_dist=True,
                                        force_split_k=True)
    out2_only = pcbm_forward_prepared(emb2, params2, return_dist=False,
                                      force_split_k=True)
    jax.block_until_ready((out2, dist2, out2_only))

    margins2 = (cavs2 @ emb2.T + intercepts) / norms
    dist2_ref = margins2.T
    out2_ref = dist2_ref @ weight.T + bias
    assert jnp.allclose(dist2, dist2_ref, atol=1e-4, rtol=1e-4)
    assert jnp.allclose(out2, out2_ref, atol=1e-4, rtol=1e-4)
    assert jnp.allclose(out2_only, out2_ref, atol=1e-4, rtol=1e-4)

    print("KERNEL_OK")
</pallas_src>

<mosaic_0001>
module attributes {stable_mosaic.version = 11 : i64} {
  func.func @kernel(%arg0: i32, %arg1: memref<8x128xf32, #tpu.memory_space<vmem>>, %arg2: memref<128x128xf32, #tpu.memory_space<vmem>>, %arg3: memref<1x128xf32, #tpu.memory_space<vmem>>, %arg4: memref<128x128xf32, #tpu.memory_space<vmem>>, %arg5: memref<1x128xf32, #tpu.memory_space<vmem>>, %arg6: memref<8x128xf32, #tpu.memory_space<vmem>>, %arg7: memref<8x128xf32, #tpu.memory_space<vmem>>) attributes {dimension_semantics = [#tpu.dimension_semantics<parallel>], iteration_bounds = array<i64: 1>, scalar_prefetch = 0 : i64, scratch_operands = 0 : i64, tpu.core_type = #tpu.core_type<tc>, window_params = [{transform_indices = @transform_0, window_bounds = array<i64: 8, 128>}, {pipeline_mode = #tpu.pipeline_mode<synchronous>, transform_indices = @transform_1, window_bounds = array<i64: 128, 128>}, {pipeline_mode = #tpu.pipeline_mode<synchronous>, transform_indices = @transform_2, window_bounds = array<i64: 1, 128>}, {pipeline_mode = #tpu.pipeline_mode<synchronous>, transform_indices = @transform_3, window_bounds = array<i64: 128, 128>}, {pipeline_mode = #tpu.pipeline_mode<synchronous>, transform_indices = @transform_4, window_bounds = array<i64: 1, 128>}, {transform_indices = @transform_5, window_bounds = array<i64: 8, 128>}, {transform_indices = @transform_6, window_bounds = array<i64: 8, 128>}]} {
    %c0 = arith.constant 0 : index
    %c0_0 = arith.constant 0 : index
    %0 = vector.load %arg1[%c0, %c0_0] : memref<8x128xf32, #tpu.memory_space<vmem>>, vector<8x128xf32>
    %c0_1 = arith.constant 0 : index
    %c0_2 = arith.constant 0 : index
    %1 = vector.load %arg2[%c0_1, %c0_2] : memref<128x128xf32, #tpu.memory_space<vmem>>, vector<128x128xf32>
    %cst = arith.constant dense<0.000000e+00> : vector<8x128xf32>
    %2 = tpu.matmul %0, %1, %cst {dimension_numbers = #tpu.dot_dimension_numbers<[1], [0], [0], [1], [0, 0, 1, 1], [], []>} : vector<8x128xf32>, vector<128x128xf32>, vector<8x128xf32> -> vector<8x128xf32>
    %c0_3 = arith.constant 0 : index
    %c0_4 = arith.constant 0 : index
    %3 = vector.load %arg3[%c0_3, %c0_4] : memref<1x128xf32, #tpu.memory_space<vmem>>, vector<1x128xf32>
    %4 = vector.broadcast %3 : vector<1x128xf32> to vector<8x128xf32>
    %5 = arith.addf %2, %4 : vector<8x128xf32>
    %c0_5 = arith.constant 0 : index
    %c0_6 = arith.constant 0 : index
    %6 = vector.load %arg7[%c0_5, %c0_6] : memref<8x128xf32, #tpu.memory_space<vmem>>, vector<8x128xf32>
    tpu.vector_store %arg7[%c0_5, %c0_6], %5 {strides = array<i32>} : memref<8x128xf32, #tpu.memory_space<vmem>>, vector<8x128xf32>,
    %c0_7 = arith.constant 0 : index
    %c0_8 = arith.constant 0 : index
    %7 = vector.load %arg4[%c0_7, %c0_8] : memref<128x128xf32, #tpu.memory_space<vmem>>, vector<128x128xf32>
    %cst_9 = arith.constant dense<0.000000e+00> : vector<8x128xf32>
    %8 = tpu.matmul %5, %7, %cst_9 {dimension_numbers = #tpu.dot_dimension_numbers<[1], [0], [0], [1], [0, 0, 1, 1], [], []>} : vector<8x128xf32>, vector<128x128xf32>, vector<8x128xf32> -> vector<8x128xf32>
    %c0_10 = arith.constant 0 : index
    %c0_11 = arith.constant 0 : index
    %9 = vector.load %arg5[%c0_10, %c0_11] : memref<1x128xf32, #tpu.memory_space<vmem>>, vector<1x128xf32>
    %10 = vector.broadcast %9 : vector<1x128xf32> to vector<8x128xf32>
    %11 = arith.addf %8, %10 : vector<8x128xf32>
    %c0_12 = arith.constant 0 : index
    %c0_13 = arith.constant 0 : index
    %12 = vector.load %arg6[%c0_12, %c0_13] : memref<8x128xf32, #tpu.memory_space<vmem>>, vector<8x128xf32>
    tpu.vector_store %arg6[%c0_12, %c0_13], %11 {strides = array<i32>} : memref<8x128xf32, #tpu.memory_space<vmem>>, vector<8x128xf32>,
    return
  }
  func.func @transform_0(%arg0: i32) -> (i32, i32) {
    %c0_i32 = arith.constant 0 : i32
    %c0_i32_0 = arith.constant 0 : i32
    return %arg0, %c0_i32 : i32, i32
  }
  func.func @transform_1(%arg0: i32) -> (i32, i32) {
    %c0_i32 = arith.constant 0 : i32
    %c0_i32_0 = arith.constant 0 : i32
    %c0_i32_1 = arith.constant 0 : i32
    return %c0_i32, %c0_i32_0 : i32, i32
  }
  func.func @transform_2(%arg0: i32) -> (i32, i32) {
    %c0_i32 = arith.constant 0 : i32
    %c0_i32_0 = arith.constant 0 : i32
    %c0_i32_1 = arith.constant 0 : i32
    return %c0_i32, %c0_i32_0 : i32, i32
  }
  func.func @transform_3(%arg0: i32) -> (i32, i32) {
    %c0_i32 = arith.constant 0 : i32
    %c0_i32_0 = arith.constant 0 : i32
    %c0_i32_1 = arith.constant 0 : i32
    return %c0_i32, %c0_i32_0 : i32, i32
  }
  func.func @transform_4(%arg0: i32) -> (i32, i32) {
    %c0_i32 = arith.constant 0 : i32
    %c0_i32_0 = arith.constant 0 : i32
    %c0_i32_1 = arith.constant 0 : i32
    return %c0_i32, %c0_i32_0 : i32, i32
  }
  func.func @transform_5(%arg0: i32) -> (i32, i32) {
    %c0_i32 = arith.constant 0 : i32
    %c0_i32_0 = arith.constant 0 : i32
    return %arg0, %c0_i32 : i32, i32
  }
  func.func @transform_6(%arg0: i32) -> (i32, i32) {
    %c0_i32 = arith.constant 0 : i32
    %c0_i32_0 = arith.constant 0 : i32
    return %arg0, %c0_i32 : i32, i32
  }
}

</mosaic_0001>

<llo_original>
// kernel: tpu_custom_call.1
$region0: #{tpu_custom_call.1}
  #allocation0 [shape = 'u32[]', space=smem, size = 0x4, offset = 0x4, fixed_abs, tag = 'smem constant byte address 0x4 - core index']
  #allocation1 [shape = 'u32[144,128]{1,0:T(1,128)}', space=vmem, size = 0x12000, scoped, tag = 'internal scratch']
  %s0 = inlined_call_operand.hbm [shape: f32[8,128], index: 0, kind: input, shape index: {}]
  %s1 = inlined_call_operand.hbm [shape: f32[128,128], index: 1, kind: input, shape index: {}]
  %s2 = inlined_call_operand.vmem [shape: f32[1,128], index: 2, kind: input, shape index: {}]
  %s3 = inlined_call_operand.hbm [shape: f32[128,128], index: 3, kind: input, shape index: {}]
  %s4 = inlined_call_operand.vmem [shape: f32[1,128], index: 4, kind: input, shape index: {}]
  %s5 = inlined_call_operand.hbm [shape: f32[8,128], index: 5, kind: output, shape index: {0}]
  %s6 = inlined_call_operand.hbm [shape: f32[8,128], index: 6, kind: output, shape index: {1}]
  %7 = xla_tuple %s5, %s6
  %s8 = sld [smem:[#allocation0]]
  $region50: #{tpu_custom_call.1} parent=0
    _
  %s10 = ssub.s32 1, %s8
  %s11 = scalar_select 0, %s10, %s8
  $region1: #{tpu_custom_call.1} parent=0
    #allocation2 [shape = 'u8[4096]{0}', space=vmem, size = 0x1000, scoped, tag = 'input window, operand 0, single buffered']
    #allocation3 [shape = 's32[1]{0}', space=sflag, size = 0x4, scoped, tag = 'scoped memory for tpu_custom_call.1']
    #allocation4 [shape = 's32[1]{0}', space=sflag, size = 0x4, scoped, tag = 'scoped memory for tpu_custom_call.1']
    #allocation5 [shape = 'u8[65536]{0}', space=vmem, size = 0x10000, scoped, tag = 'input window, operand 1, single buffered']
    #allocation6 [shape = 's32[1]{0}', space=sflag, size = 0x4, scoped, tag = 'scoped memory for tpu_custom_call.1']
    #allocation7 [shape = 'u8[65536]{0}', space=vmem, size = 0x10000, scoped, tag = 'input window, operand 3, single buffered']
    #allocation8 [shape = 'u8[4096]{0}', space=vmem, size = 0x1000, scoped, tag = 'output window, operand 0, single buffered']
    #allocation9 [shape = 'u8[4096]{0}', space=vmem, size = 0x1000, scoped, tag = 'output window, operand 1, single buffered']
    #allocation10 [shape = 's32[1]{0}', space=sflag, size = 0x4, scoped, tag = 'scoped memory for tpu_custom_call.1']
    %12 = vsyncpa [#allocation3], 0
    %13 = vsyncpa [#allocation6], 0
    %14 = vsyncpa [#allocation4], 0
    %15 = vsyncpa [#allocation10], 0
    // Predicated region
    $region2: #{tpu_custom_call.1} parent=1 // pred_check
      _
    $region3: #{tpu_custom_call.1} parent=1 // pred_check_branch
      %17 = sbr.rel (0) target = $region5
    $region4: #{tpu_custom_call.1} parent=1 // pred_region
      %s19 = ssub.s32 128, 128
      %20 = vsyncadd [#allocation3], %s19
      %s22 = sshll.u32 [#allocation2], 4
      %s23 = int_to_ptr.vmem [resolvable:$true] %s22
      %25 = dma.hbm_to_vmem [thread:$0]  %s0, 128, %s23, [#allocation3]
    $region5: #{tpu_custom_call.1} parent=1 // pred_fallthru
      _
    // Predicated region
    $region6: #{tpu_custom_call.1} parent=1 // pred_check
      _
    $region7: #{tpu_custom_call.1} parent=1 // pred_check_branch
      %27 = sbr.rel (0) target = $region9
    $region8: #{tpu_custom_call.1} parent=1 // pred_region
      %s29 = ssub.s32 2048, 2048
      %30 = vsyncadd [#allocation6], %s29
      %s31 = sshll.u32 [#allocation5], 4
      %s32 = int_to_ptr.vmem [resolvable:$true] %s31
      %37 = dma.hbm_to_vmem [thread:$0]  %s1, 2048, %s32, [#allocation6], 128, 128, 8
    $region9: #{tpu_custom_call.1} parent=1 // pred_fallthru
      _
    // Predicated region
    $region10: #{tpu_custom_call.1} parent=1 // pred_check
      _
    $region11: #{tpu_custom_call.1} parent=1 // pred_check_branch
      %39 = sbr.rel (0) target = $region13
    $region12: #{tpu_custom_call.1} parent=1 // pred_region
      _
    $region13: #{tpu_custom_call.1} parent=1 // pred_fallthru
      _
    // Predicated region
    $region14: #{tpu_custom_call.1} parent=1 // pred_check
      _
    $region15: #{tpu_custom_call.1} parent=1 // pred_check_branch
      %41 = sbr.rel (0) target = $region17
    $region16: #{tpu_custom_call.1} parent=1 // pred_region
      %s43 = ssub.s32 2048, 2048
      %44 = vsyncadd [#allocation6], %s43
      %s45 = sshll.u32 [#allocation7], 4
      %s46 = int_to_ptr.vmem [resolvable:$true] %s45
      %51 = dma.hbm_to_vmem [thread:$0]  %s3, 2048, %s46, [#allocation6], 128, 128, 8
    $region17: #{tpu_custom_call.1} parent=1 // pred_fallthru
      _
    // Predicated region
    $region18: #{tpu_custom_call.1} parent=1 // pred_check
      _
    $region19: #{tpu_custom_call.1} parent=1 // pred_check_branch
      %53 = sbr.rel (0) target = $region21
    $region20: #{tpu_custom_call.1} parent=1 // pred_region
      _
    $region21: #{tpu_custom_call.1} parent=1 // pred_fallthru
      _
    // Predicated region
    $region22: #{tpu_custom_call.1} parent=1 // pred_check
      _
    $region23: #{tpu_custom_call.1} parent=1 // pred_check_branch
      %55 = sbr.rel (0) target = $region25
    $region24: #{tpu_custom_call.1} parent=1 // pred_region
      %56 = dma.done [#allocation3], 128
    $region25: #{tpu_custom_call.1} parent=1 // pred_fallthru
      _
    // Predicated region
    $region26: #{tpu_custom_call.1} parent=1 // pred_check
      _
    $region27: #{tpu_custom_call.1} parent=1 // pred_check_branch
      %58 = sbr.rel (0) target = $region29
    $region28: #{tpu_custom_call.1} parent=1 // pred_region
      %59 = dma.done [#allocation6], 2048
    $region29: #{tpu_custom_call.1} parent=1 // pred_fallthru
      _
    // Predicated region
    $region30: #{tpu_custom_call.1} parent=1 // pred_check
      _
    $region31: #{tpu_custom_call.1} parent=1 // pred_check_branch
      %61 = sbr.rel (0) target = $region33
    $region32: #{tpu_custom_call.1} parent=1 // pred_region
      %62 = dma.done [#allocation6], 2048
    $region33: #{tpu_custom_call.1} parent=1 // pred_fallthru
      _
    %v63 = vld [vmem:[#allocation2] sm:$0xff]
    %v64 = vld [vmem:[#allocation5] sm:$0xff]
    %v65 = vld [vmem:[#allocation5 + $0x8] sm:$0xff]
    %v66 = vld [vmem:[#allocation5 + $0x10] sm:$0xff]
    %v67 = vld [vmem:[#allocation5 + $0x18] sm:$0xff]
    %v68 = vld [vmem:[#allocation5 + $0x20] sm:$0xff]
    %v69 = vld [vmem:[#allocation5 + $0x28] sm:$0xff]
    %v70 = vld [vmem:[#allocation5 + $0x30] sm:$0xff]
    %v71 = vld [vmem:[#allocation5 + $0x38] sm:$0xff]
    %v72 = vld [vmem:[#allocation5 + $0x40] sm:$0xff]
    %v73 = vld [vmem:[#allocation5 + $0x48] sm:$0xff]
    %v74 = vld [vmem:[#allocation5 + $0x50] sm:$0xff]
    %v75 = vld [vmem:[#allocation5 + $0x58] sm:$0xff]
    %v76 = vld [vmem:[#allocation5 + $0x60] sm:$0xff]
    %v77 = vld [vmem:[#allocation5 + $0x68] sm:$0xff]
    %v78 = vld [vmem:[#allocation5 + $0x70] sm:$0xff]
    %v79 = vld [vmem:[#allocation5 + $0x78] sm:$0xff]
    %v80 = vld [vmem:[%s2] sm:$0x1]
    %v82 = vlaneseq
    %v83 = vshrl.u32 %v82, 7
    %v84 = vsub.s32 0, %v83
    %v85 = vrot.slane %v80, %v84
    %87 = vmatprep.subr.mxu0 0.0
    %88 = vmatpush1.msra.mxu0 %v64
    %89 = vmatprep.subr.mxu0 0.0
    %90 = vmatpush1.msra.mxu0 %v65
    %91 = vmatprep.subr.mxu0 0.0
    %92 = vmatpush1.msra.mxu0 %v66
    %93 = vmatprep.subr.mxu0 0.0
    %94 = vmatpush1.msra.mxu0 %v67
    %95 = vmatprep.subr.mxu0 0.0
    %96 = vmatpush1.msra.mxu0 %v68
    %97 = vmatprep.subr.mxu0 0.0
    %98 = vmatpush1.msra.mxu0 %v69
    %99 = vmatprep.subr.mxu0 0.0
    %100 = vmatpush1.msra.mxu0 %v70
    %101 = vmatprep.subr.mxu0 0.0
    %102 = vmatpush1.msra.mxu0 %v71
    %103 = vmatprep.subr.mxu0 0.0
    %104 = vmatpush1.msra.mxu0 %v72
    %105 = vmatprep.subr.mxu0 0.0
    %106 = vmatpush1.msra.mxu0 %v73
    %107 = vmatprep.subr.mxu0 0.0
    %108 = vmatpush1.msra.mxu0 %v74
    %109 = vmatprep.subr.mxu0 0.0
    %110 = vmatpush1.msra.mxu0 %v75
    %111 = vmatprep.subr.mxu0 0.0
    %112 = vmatpush1.msra.mxu0 %v76
    %113 = vmatprep.subr.mxu0 0.0
    %114 = vmatpush1.msra.mxu0 %v77
    %115 = vmatprep.subr.mxu0 0.0
    %116 = vmatpush1.msra.mxu0 %v78
    %117 = vmatprep.subr.mxu0 0.0
    %118 = vmatpush1.msra.mxu0 %v79
    %119 = vmatprep.subr.mxu0 0.0
    %120 = vmatpush1.msra.mxu0 0.0
    %121 = vmatprep.subr.mxu0 0.0
    %122 = vmatpush1.msra.mxu0 0.0
    %123 = vmatprep.subr.mxu0 0.0
    %124 = vmatpush1.msra.mxu0 0.0
    %125 = vmatprep.subr.mxu0 0.0
    %126 = vmatpush1.msra.mxu0 0.0
    %127 = vmatprep.subr.mxu0 0.0
    %128 = vmatpush1.msra.mxu0 0.0
    %129 = vmatprep.subr.mxu0 0.0
    %130 = vmatpush1.msra.mxu0 0.0
    %131 = vmatprep.subr.mxu0 0.0
    %132 = vmatpush1.msra.mxu0 0.0
    %133 = vmatprep.subr.mxu0 0.0
    %134 = vmatpush1.msra.mxu0 0.0
    %135 = vmatprep.subr.mxu0 0.0
    %136 = vmatpush1.msra.mxu0 0.0
    %137 = vmatprep.subr.mxu0 0.0
    %138 = vmatpush1.msra.mxu0 0.0
    %139 = vmatprep.subr.mxu0 0.0
    %140 = vmatpush1.msra.mxu0 0.0
    %141 = vmatprep.subr.mxu0 0.0
    %142 = vmatpush1.msra.mxu0 0.0
    %143 = vmatprep.subr.mxu0 0.0
    %144 = vmatpush1.msra.mxu0 0.0
    %145 = vmatprep.subr.mxu0 0.0
    %146 = vmatpush1.msra.mxu0 0.0
    %147 = vmatprep.subr.mxu0 0.0
    %148 = vmatpush1.msra.mxu0 0.0
    %149 = vmatprep.subr.mxu0 0.0
    %150 = vmatpush1.msra.mxu0 0.0
    %151 = vmatprep.mubr.f32.mxu0 0.0
    %152 = vmatmul.mubr.f32.gmra.mrb[0].mxu0 %v63
    %v153 = vpop.f32.mrb[0].mxu0
    %v154 = vadd.f32 %v85, %v153
    %v155 = vpop.f32.mrb[0].mxu0
    %156 = vdwg.mxu0
    %157 = vst [vmem:[#allocation9] sm:$0xff] %v154
    %v158 = vld [vmem:[#allocation7] sm:$0xff]
    %v159 = vld [vmem:[#allocation7 + $0x8] sm:$0xff]
    %v160 = vld [vmem:[#allocation7 + $0x10] sm:$0xff]
    %v161 = vld [vmem:[#allocation7 + $0x18] sm:$0xff]
    %v162 = vld [vmem:[#allocation7 + $0x20] sm:$0xff]
    %v163 = vld [vmem:[#allocation7 + $0x28] sm:$0xff]
    %v164 = vld [vmem:[#allocation7 + $0x30] sm:$0xff]
    %v165 = vld [vmem:[#allocation7 + $0x38] sm:$0xff]
    %v166 = vld [vmem:[#allocation7 + $0x40] sm:$0xff]
    %v167 = vld [vmem:[#allocation7 + $0x48] sm:$0xff]
    %v168 = vld [vmem:[#allocation7 + $0x50] sm:$0xff]
    %v169 = vld [vmem:[#allocation7 + $0x58] sm:$0xff]
    %v170 = vld [vmem:[#allocation7 + $0x60] sm:$0xff]
    %v171 = vld [vmem:[#allocation7 + $0x68] sm:$0xff]
    %v172 = vld [vmem:[#allocation7 + $0x70] sm:$0xff]
    %v173 = vld [vmem:[#allocation7 + $0x78] sm:$0xff]
    %v174 = vld [vmem:[%s4] sm:$0x1]
    %v176 = vlaneseq
    %v177 = vshrl.u32 %v176, 7
    %v178 = vsub.s32 0, %v177
    %v179 = vrot.slane %v174, %v178
    %181 = vmatprep.subr.mxu0 0.0
    %182 = vmatpush1.msra.mxu0 %v158
    %183 = vmatprep.subr.mxu0 0.0
    %184 = vmatpush1.msra.mxu0 %v159
    %185 = vmatprep.subr.mxu0 0.0
    %186 = vmatpush1.msra.mxu0 %v160
    %187 = vmatprep.subr.mxu0 0.0
    %188 = vmatpush1.msra.mxu0 %v161
    %189 = vmatprep.subr.mxu0 0.0
    %190 = vmatpush1.msra.mxu0 %v162
    %191 = vmatprep.subr.mxu0 0.0
    %192 = vmatpush1.msra.mxu0 %v163
    %193 = vmatprep.subr.mxu0 0.0
    %194 = vmatpush1.msra.mxu0 %v164
    %195 = vmatprep.subr.mxu0 0.0
    %196 = vmatpush1.msra.mxu0 %v165
    %197 = vmatprep.subr.mxu0 0.0
    %198 = vmatpush1.msra.mxu0 %v166
    %199 = vmatprep.subr.mxu0 0.0
    %200 = vmatpush1.msra.mxu0 %v167
    %201 = vmatprep.subr.mxu0 0.0
    %202 = vmatpush1.msra.mxu0 %v168
    %203 = vmatprep.subr.mxu0 0.0
    %204 = vmatpush1.msra.mxu0 %v169
    %205 = vmatprep.subr.mxu0 0.0
    %206 = vmatpush1.msra.mxu0 %v170
    %207 = vmatprep.subr.mxu0 0.0
    %208 = vmatpush1.msra.mxu0 %v171
    %209 = vmatprep.subr.mxu0 0.0
    %210 = vmatpush1.msra.mxu0 %v172
    %211 = vmatprep.subr.mxu0 0.0
    %212 = vmatpush1.msra.mxu0 %v173
    %213 = vmatprep.subr.mxu0 0.0
    %214 = vmatpush1.msra.mxu0 0.0
    %215 = vmatprep.subr.mxu0 0.0
    %216 = vmatpush1.msra.mxu0 0.0
    %217 = vmatprep.subr.mxu0 0.0
    %218 = vmatpush1.msra.mxu0 0.0
    %219 = vmatprep.subr.mxu0 0.0
    %220 = vmatpush1.msra.mxu0 0.0
    %221 = vmatprep.subr.mxu0 0.0
    %222 = vmatpush1.msra.mxu0 0.0
    %223 = vmatprep.subr.mxu0 0.0
    %224 = vmatpush1.msra.mxu0 0.0
    %225 = vmatprep.subr.mxu0 0.0
    %226 = vmatpush1.msra.mxu0 0.0
    %227 = vmatprep.subr.mxu0 0.0
    %228 = vmatpush1.msra.mxu0 0.0
    %229 = vmatprep.subr.mxu0 0.0
    %230 = vmatpush1.msra.mxu0 0.0
    %231 = vmatprep.subr.mxu0 0.0
    %232 = vmatpush1.msra.mxu0 0.0
    %233 = vmatprep.subr.mxu0 0.0
    %234 = vmatpush1.msra.mxu0 0.0
    %235 = vmatprep.subr.mxu0 0.0
    %236 = vmatpush1.msra.mxu0 0.0
    %237 = vmatprep.subr.mxu0 0.0
    %238 = vmatpush1.msra.mxu0 0.0
    %239 = vmatprep.subr.mxu0 0.0
    %240 = vmatpush1.msra.mxu0 0.0
    %241 = vmatprep.subr.mxu0 0.0
    %242 = vmatpush1.msra.mxu0 0.0
    %243 = vmatprep.subr.mxu0 0.0
    %244 = vmatpush1.msra.mxu0 0.0
    %245 = vmatprep.mubr.f32.mxu0 0.0
    %246 = vmatmul.mubr.f32.gmra.mrb[0].mxu0 %v154
    %v247 = vpop.f32.mrb[0].mxu0
    %v248 = vadd.f32 %v179, %v247
    %v249 = vpop.f32.mrb[0].mxu0
    %250 = vdwg.mxu0
    %251 = vst [vmem:[#allocation8] sm:$0xff] %v248
    // Predicated region
    $region34: #{tpu_custom_call.1} parent=1 // pred_check
      _
    $region35: #{tpu_custom_call.1} parent=1 // pred_check_branch
      %253 = sbr.rel (0) target = $region37
    $region36: #{tpu_custom_call.1} parent=1 // pred_region
      %s255 = ssub.s32 128, 128
      %256 = vsyncadd [#allocation4], %s255
      %s258 = sshll.u32 [#allocation8], 4
      %s259 = int_to_ptr.vmem [resolvable:$true] %s258
      %261 = dma.vmem_to_hbm [thread:$0]  %s259, 128, %s5, [#allocation4]
    $region37: #{tpu_custom_call.1} parent=1 // pred_fallthru
      _
    // Predicated region
    $region38: #{tpu_custom_call.1} parent=1 // pred_check
      _
    $region39: #{tpu_custom_call.1} parent=1 // pred_check_branch
      %263 = sbr.rel (0) target = $region41
    $region40: #{tpu_custom_call.1} parent=1 // pred_region
      %s265 = ssub.s32 128, 128
      %266 = vsyncadd [#allocation10], %s265
      %s268 = sshll.u32 [#allocation9], 4
      %s269 = int_to_ptr.vmem [resolvable:$true] %s268
      %271 = dma.vmem_to_hbm [thread:$0]  %s269, 128, %s6, [#allocation10]
    $region41: #{tpu_custom_call.1} parent=1 // pred_fallthru
      _
    // Predicated region
    $region42: #{tpu_custom_call.1} parent=1 // pred_check
      _
    $region43: #{tpu_custom_call.1} parent=1 // pred_check_branch
      %273 = sbr.rel (0) target = $region45
    $region44: #{tpu_custom_call.1} parent=1 // pred_region
      %274 = dma.done [#allocation4], 128
    $region45: #{tpu_custom_call.1} parent=1 // pred_fallthru
      _
    // Predicated region
    $region46: #{tpu_custom_call.1} parent=1 // pred_check
      _
    $region47: #{tpu_custom_call.1} parent=1 // pred_check_branch
      %276 = sbr.rel (0) target = $region49
    $region48: #{tpu_custom_call.1} parent=1 // pred_region
      %277 = dma.done [#allocation10], 128
    $region49: #{tpu_custom_call.1} parent=1 // pred_fallthru
      _
    %278 = vsyncpa [#allocation3], 1
    %279 = vsyncpa [#allocation6], 1
    %280 = vsyncpa [#allocation4], 1
    %281 = vsyncpa [#allocation10], 1

</llo_original>
